<compile_context>
chip_gen: v7x
topology: tpu7x:2x2x1
jax: 0.10.0
libtpu: 0.0.40
codegen_flags: <defaults>
</compile_context>

<pallas_src>
from functools import reduce
from math import factorial

import numpy as np
import jax
import jax.numpy as jnp
from jax.experimental import pallas as pl
from jax.experimental.pallas import tpu as pltpu


# ---------- order-bank helpers (pure python, mirroring the PyTorch module) ----------
def _inv_equal_order_m(d, m):
    A = []
    assert d >= 1 and m >= 0
    if d == 1:
        return [[m]]
    if m == 0:
        return [[0] * d]
    for k in range(m + 1):
        B = _inv_equal_order_m(d - 1, m - k)
        for b in B:
            b.append(k)
        A = A + B
    return A


def _less_order_m(d, m):
    A = []
    for k in range(m + 1):
        B = _inv_equal_order_m(d, k)
        for b in B:
            b.reverse()
        B.sort()
        B.reverse()
        A.append(B)
    return A


def moment_bank_params(dim, kernel_size, max_order, dx=1.0):
    """Deterministic re-implementation of MomentBank.__init__ parameter setup."""
    if isinstance(kernel_size, int):
        kernel_size = [kernel_size] * dim
    assert min(kernel_size) > max_order
    if not np.iterable(dx):
        dx = [dx] * dim
    order_bank = _less_order_m(dim, max_order)
    flat = [o for a in order_bank for o in a]
    N = len(flat)

    moment = np.zeros([N] + list(kernel_size), dtype=np.float64)
    scale = np.ones(N, dtype=np.float64)
    for i, o in enumerate(flat):
        moment[(i,) + tuple(o)] = 1.0
        s = reduce(lambda a, b: a * b, (dx[j] ** oj for j, oj in enumerate(o)), 1)
        scale[i] = 1.0 / s

    # Per-axis inverse moment (Vandermonde-like) matrices used by aTEAM's M2K:
    #   M_j[i, x] = ((x - (l-1)//2)**i) / i!,  invM_j = inv(M_j)   (inverted in f64)
    invMs = []
    for l in kernel_size:
        M = np.zeros((l, l), dtype=np.float64)
        for i in range(l):
            M[i] = ((np.arange(l) - (l - 1) // 2) ** i) / float(factorial(i))
        invMs.append(np.linalg.inv(M))
    return moment, scale, invMs


# ------------------------------- Pallas kernel --------------------------------------
def _m2k_kernel(m_wide_ref, invm0_ref, bd_ref, scale_ref, out_ref):
    # Single invocation (no grid): everything lives in VMEM and fits in a few vregs.
    # m_wide_ref : (k1, N*k2)   moment, wide along the lane axis (column block n = moment[n])
    # invm0_ref  : (k1, k1)     left inverse-moment matrix
    # bd_ref     : (N*k2, N*k2) block-diagonal of invM1^T (N identical diagonal blocks)
    # scale_ref  : (1, N*k2)    per-kernel scale, repeated along k2
    # out_ref    : (k1, N*k2)   lane-dense output slab
    t = jnp.dot(invm0_ref[...], m_wide_ref[...], preferred_element_type=jnp.float32)
    k = jnp.dot(t, bd_ref[...], preferred_element_type=jnp.float32)
    out_ref[...] = (k * scale_ref[...]).astype(out_ref.dtype)


def moment_bank_forward(moment, scale, invM0, invM1):
    """MomentBank.forward(): returns the scaled differential kernels, shape (N,1,k1,k2)."""
    N, k1, k2 = moment.shape

    # --- wrapper glue (layout plumbing; all constant-shaped, done once per call) ---
    # column block n of m_wide is moment[n]  ->  (k1, N*k2)
    m_wide = jnp.transpose(moment, (1, 0, 2)).reshape(k1, N * k2)
    # block-diagonal with N copies of invM1^T on the diagonal  ->  (N*k2, N*k2)
    bd = jnp.kron(jnp.eye(N, dtype=jnp.float32), invM1.T.astype(jnp.float32))
    # scale[n] repeated over the k2 columns of block n  ->  (1, N*k2)
    scale_wide = jnp.repeat(scale.astype(jnp.float32), k2)[None, :]

    out_wide = pl.pallas_call(
        _m2k_kernel,
        out_shape=jax.ShapeDtypeStruct((k1, N * k2), jnp.float32),
        in_specs=[
            pl.BlockSpec(memory_space=pltpu.MemorySpace.VMEM),
            pl.BlockSpec(memory_space=pltpu.MemorySpace.VMEM),
            pl.BlockSpec(memory_space=pltpu.MemorySpace.VMEM),
            pl.BlockSpec(memory_space=pltpu.MemorySpace.VMEM),
        ],
        out_specs=pl.BlockSpec(memory_space=pltpu.MemorySpace.VMEM),
    )(m_wide, invM0.astype(jnp.float32), bd, scale_wide)

    # (k1, N*k2) -> (N, k1, k2) -> (N, 1, k1, k2)  OIHW conv-weight layout
    return jnp.transpose(out_wide.reshape(k1, N, k2), (1, 0, 2))[:, None]


# ----------------------------------- main --------------------------------------------
if __name__ == "__main__":
    # MomentBank(dim=2, kernel_size=5, max_order=2, dx=0.1) -> N = 6 kernels of size 5x5
    dim, kernel_size, max_order, dx = 2, 5, 2, 0.1
    moment_np, scale_np, invMs = moment_bank_params(dim, kernel_size, max_order, dx)

    # moment is a trainable nn.Parameter; perturb its deterministic init with PRNGKey(0)
    # so the bilinear transform is exercised on a non-trivial tensor.
    key = jax.random.PRNGKey(0)
    moment = jnp.asarray(moment_np, jnp.float32) + 0.01 * jax.random.normal(
        key, moment_np.shape, dtype=jnp.float32
    )
    scale = jnp.asarray(scale_np, jnp.float32)
    invM0 = jnp.asarray(invMs[0], jnp.float32)
    invM1 = jnp.asarray(invMs[1], jnp.float32)

    out = moment_bank_forward(moment, scale, invM0, invM1)
    out = jax.block_until_ready(out)

    # pure-JAX reference of MomentBank.kernel(): K[n] = invM0 @ moment[n] @ invM1^T, scaled
    ref = jnp.einsum("ix,nxy,jy->nij", invM0, moment, invM1) * scale[:, None, None]
    ref = ref[:, None]

    assert out.shape == (moment.shape[0], 1, kernel_size, kernel_size), out.shape
    np.testing.assert_allclose(np.asarray(out), np.asarray(ref), rtol=1e-4, atol=1e-5)
    print("KERNEL_OK")
</pallas_src>

<mosaic_0001>
module attributes {stable_mosaic.version = 11 : i64} {
  func.func @_m2k_kernel(%arg0: memref<5x30xf32, #tpu.memory_space<vmem>>, %arg1: memref<5x5xf32, #tpu.memory_space<vmem>>, %arg2: memref<30x30xf32, #tpu.memory_space<vmem>>, %arg3: memref<1x30xf32, #tpu.memory_space<vmem>>, %arg4: memref<5x30xf32, #tpu.memory_space<vmem>>) attributes {dimension_semantics = [], scalar_prefetch = 0 : i64, scratch_operands = 0 : i64, tpu.core_type = #tpu.core_type<tc>} {
    %c0 = arith.constant 0 : index
    %c0_0 = arith.constant 0 : index
    %0 = vector.load %arg1[%c0, %c0_0] : memref<5x5xf32, #tpu.memory_space<vmem>>, vector<5x5xf32>
    %c0_1 = arith.constant 0 : index
    %c0_2 = arith.constant 0 : index
    %1 = vector.load %arg0[%c0_1, %c0_2] : memref<5x30xf32, #tpu.memory_space<vmem>>, vector<5x30xf32>
    %cst = arith.constant dense<0.000000e+00> : vector<5x30xf32>
    %2 = tpu.matmul %0, %1, %cst {dimension_numbers = #tpu.dot_dimension_numbers<[1], [0], [0], [1], [0, 0, 1, 1], [], []>} : vector<5x5xf32>, vector<5x30xf32>, vector<5x30xf32> -> vector<5x30xf32>
    %c0_3 = arith.constant 0 : index
    %c0_4 = arith.constant 0 : index
    %3 = vector.load %arg2[%c0_3, %c0_4] : memref<30x30xf32, #tpu.memory_space<vmem>>, vector<30x30xf32>
    %cst_5 = arith.constant dense<0.000000e+00> : vector<5x30xf32>
    %4 = tpu.matmul %2, %3, %cst_5 {dimension_numbers = #tpu.dot_dimension_numbers<[1], [0], [0], [1], [0, 0, 1, 1], [], []>} : vector<5x30xf32>, vector<30x30xf32>, vector<5x30xf32> -> vector<5x30xf32>
    %c0_6 = arith.constant 0 : index
    %c0_7 = arith.constant 0 : index
    %5 = vector.load %arg3[%c0_6, %c0_7] : memref<1x30xf32, #tpu.memory_space<vmem>>, vector<1x30xf32>
    %6 = vector.broadcast %5 : vector<1x30xf32> to vector<5x30xf32>
    %7 = arith.mulf %4, %6 : vector<5x30xf32>
    %c0_8 = arith.constant 0 : index
    %c0_9 = arith.constant 0 : index
    %8 = vector.load %arg4[%c0_8, %c0_9] : memref<5x30xf32, #tpu.memory_space<vmem>>, vector<5x30xf32>
    tpu.vector_store %arg4[%c0_8, %c0_9], %7 {strides = array<i32>} : memref<5x30xf32, #tpu.memory_space<vmem>>, vector<5x30xf32>,
    return
  }
}

</mosaic_0001>

<llo_original>
// kernel: tpu_custom_call.1
$region0: #{tpu_custom_call.1}
  #allocation0 [shape = 'u32[]', space=smem, size = 0x4, offset = 0x4, fixed_abs, tag = 'smem constant byte address 0x4 - core index']
  #allocation1 [shape = 'u32[144,128]{1,0:T(1,128)}', space=vmem, size = 0x12000, scoped, tag = 'internal scratch']
  %s0 = inlined_call_operand.hbm [shape: f32[5,30], index: 0, kind: input, shape index: {}]
  %s1 = inlined_call_operand.hbm [shape: f32[5,5], index: 1, kind: input, shape index: {}]
  %s2 = inlined_call_operand.hbm [shape: f32[30,30], index: 2, kind: input, shape index: {}]
  %s3 = inlined_call_operand.vmem [shape: f32[1,30], index: 3, kind: input, shape index: {}]
  %s4 = inlined_call_operand.hbm [shape: f32[5,30], index: 4, kind: output, shape index: {}]
  %s5 = sld [smem:[#allocation0]]
  $region38: #{tpu_custom_call.1} parent=0
    _
  %s7 = ssub.s32 1, %s5
  %s8 = scalar_select 0, %s7, %s5
  $region1: #{tpu_custom_call.1} parent=0
    #allocation2 [shape = 'u8[4096]{0}', space=vmem, size = 0x1000, scoped, tag = 'input window, operand 0, single buffered']
    #allocation3 [shape = 's32[1]{0}', space=sflag, size = 0x4, scoped, tag = 'scoped memory for tpu_custom_call.1']
    #allocation4 [shape = 's32[1]{0}', space=sflag, size = 0x4, scoped, tag = 'scoped memory for tpu_custom_call.1']
    #allocation5 [shape = 'u8[4096]{0}', space=vmem, size = 0x1000, scoped, tag = 'input window, operand 1, single buffered']
    #allocation6 [shape = 's32[1]{0}', space=sflag, size = 0x4, scoped, tag = 'scoped memory for tpu_custom_call.1']
    #allocation7 [shape = 'u8[16384]{0}', space=vmem, size = 0x4000, scoped, tag = 'input window, operand 2, single buffered']
    #allocation8 [shape = 'u8[4096]{0}', space=vmem, size = 0x1000, scoped, tag = 'output window, operand 0, single buffered']
    %9 = vsyncpa [#allocation3], 0
    %10 = vsyncpa [#allocation6], 0
    %11 = vsyncpa [#allocation4], 0
    // Predicated region
    $region2: #{tpu_custom_call.1} parent=1 // pred_check
      _
    $region3: #{tpu_custom_call.1} parent=1 // pred_check_branch
      %13 = sbr.rel (0) target = $region5
    $region4: #{tpu_custom_call.1} parent=1 // pred_region
      %s15 = ssub.s32 128, 128
      %16 = vsyncadd [#allocation3], %s15
      %s18 = sshll.u32 [#allocation2], 4
      %s19 = int_to_ptr.vmem [resolvable:$true] %s18
      %21 = dma.hbm_to_vmem [thread:$0]  %s0, 128, %s19, [#allocation3]
    $region5: #{tpu_custom_call.1} parent=1 // pred_fallthru
      _
    // Predicated region
    $region6: #{tpu_custom_call.1} parent=1 // pred_check
      _
    $region7: #{tpu_custom_call.1} parent=1 // pred_check_branch
      %23 = sbr.rel (0) target = $region9
    $region8: #{tpu_custom_call.1} parent=1 // pred_region
      %s25 = ssub.s32 128, 128
      %26 = vsyncadd [#allocation6], %s25
      %s28 = sshll.u32 [#allocation5], 4
      %s29 = int_to_ptr.vmem [resolvable:$true] %s28
      %31 = dma.hbm_to_vmem [thread:$0]  %s1, 128, %s29, [#allocation6]
    $region9: #{tpu_custom_call.1} parent=1 // pred_fallthru
      _
    // Predicated region
    $region10: #{tpu_custom_call.1} parent=1 // pred_check
      _
    $region11: #{tpu_custom_call.1} parent=1 // pred_check_branch
      %33 = sbr.rel (0) target = $region13
    $region12: #{tpu_custom_call.1} parent=1 // pred_region
      %s35 = ssub.s32 512, 512
      %36 = vsyncadd [#allocation6], %s35
      %s37 = sshll.u32 [#allocation7], 4
      %s38 = int_to_ptr.vmem [resolvable:$true] %s37
      %43 = dma.hbm_to_vmem [thread:$0]  %s2, 512, %s38, [#allocation6], 128, 128, 8
    $region13: #{tpu_custom_call.1} parent=1 // pred_fallthru
      _
    // Predicated region
    $region14: #{tpu_custom_call.1} parent=1 // pred_check
      _
    $region15: #{tpu_custom_call.1} parent=1 // pred_check_branch
      %45 = sbr.rel (0) target = $region17
    $region16: #{tpu_custom_call.1} parent=1 // pred_region
      _
    $region17: #{tpu_custom_call.1} parent=1 // pred_fallthru
      _
    // Predicated region
    $region18: #{tpu_custom_call.1} parent=1 // pred_check
      _
    $region19: #{tpu_custom_call.1} parent=1 // pred_check_branch
      %47 = sbr.rel (0) target = $region21
    $region20: #{tpu_custom_call.1} parent=1 // pred_region
      %48 = dma.done [#allocation3], 128
    $region21: #{tpu_custom_call.1} parent=1 // pred_fallthru
      _
    // Predicated region
    $region22: #{tpu_custom_call.1} parent=1 // pred_check
      _
    $region23: #{tpu_custom_call.1} parent=1 // pred_check_branch
      %50 = sbr.rel (0) target = $region25
    $region24: #{tpu_custom_call.1} parent=1 // pred_region
      %51 = dma.done [#allocation6], 128
    $region25: #{tpu_custom_call.1} parent=1 // pred_fallthru
      _
    // Predicated region
    $region26: #{tpu_custom_call.1} parent=1 // pred_check
      _
    $region27: #{tpu_custom_call.1} parent=1 // pred_check_branch
      %53 = sbr.rel (0) target = $region29
    $region28: #{tpu_custom_call.1} parent=1 // pred_region
      %54 = dma.done [#allocation6], 512
    $region29: #{tpu_custom_call.1} parent=1 // pred_fallthru
      _
    %v55 = vld [vmem:[#allocation5] sm:$0x1f]
    %v56 = vld [vmem:[#allocation2] sm:$0x1f]
    %vm57 = vcmask 39936
    %v59 = vsel %vm57, %v55, 0
    %vm61 = vcmask 1044480
    %v63 = vsel %vm61, %v56, 0
    %65 = vmatprep.subr.mxu0 0.0
    %66 = vmatpush1.msra.mxu0 %v63
    %67 = vmatprep.subr.mxu0 0.0
    %68 = vmatpush1.msra.mxu0 0.0
    %69 = vmatprep.subr.mxu0 0.0
    %70 = vmatpush1.msra.mxu0 0.0
    %71 = vmatprep.subr.mxu0 0.0
    %72 = vmatpush1.msra.mxu0 0.0
    %73 = vmatprep.subr.mxu0 0.0
    %74 = vmatpush1.msra.mxu0 0.0
    %75 = vmatprep.subr.mxu0 0.0
    %76 = vmatpush1.msra.mxu0 0.0
    %77 = vmatprep.subr.mxu0 0.0
    %78 = vmatpush1.msra.mxu0 0.0
    %79 = vmatprep.subr.mxu0 0.0
    %80 = vmatpush1.msra.mxu0 0.0
    %81 = vmatprep.subr.mxu0 0.0
    %82 = vmatpush1.msra.mxu0 0.0
    %83 = vmatprep.subr.mxu0 0.0
    %84 = vmatpush1.msra.mxu0 0.0
    %85 = vmatprep.subr.mxu0 0.0
    %86 = vmatpush1.msra.mxu0 0.0
    %87 = vmatprep.subr.mxu0 0.0
    %88 = vmatpush1.msra.mxu0 0.0
    %89 = vmatprep.subr.mxu0 0.0
    %90 = vmatpush1.msra.mxu0 0.0
    %91 = vmatprep.subr.mxu0 0.0
    %92 = vmatpush1.msra.mxu0 0.0
    %93 = vmatprep.subr.mxu0 0.0
    %94 = vmatpush1.msra.mxu0 0.0
    %95 = vmatprep.subr.mxu0 0.0
    %96 = vmatpush1.msra.mxu0 0.0
    %97 = vmatprep.subr.mxu0 0.0
    %98 = vmatpush1.msra.mxu0 0.0
    %99 = vmatprep.subr.mxu0 0.0
    %100 = vmatpush1.msra.mxu0 0.0
    %101 = vmatprep.subr.mxu0 0.0
    %102 = vmatpush1.msra.mxu0 0.0
    %103 = vmatprep.subr.mxu0 0.0
    %104 = vmatpush1.msra.mxu0 0.0
    %105 = vmatprep.subr.mxu0 0.0
    %106 = vmatpush1.msra.mxu0 0.0
    %107 = vmatprep.subr.mxu0 0.0
    %108 = vmatpush1.msra.mxu0 0.0
    %109 = vmatprep.subr.mxu0 0.0
    %110 = vmatpush1.msra.mxu0 0.0
    %111 = vmatprep.subr.mxu0 0.0
    %112 = vmatpush1.msra.mxu0 0.0
    %113 = vmatprep.subr.mxu0 0.0
    %114 = vmatpush1.msra.mxu0 0.0
    %115 = vmatprep.subr.mxu0 0.0
    %116 = vmatpush1.msra.mxu0 0.0
    %117 = vmatprep.subr.mxu0 0.0
    %118 = vmatpush1.msra.mxu0 0.0
    %119 = vmatprep.subr.mxu0 0.0
    %120 = vmatpush1.msra.mxu0 0.0
    %121 = vmatprep.subr.mxu0 0.0
    %122 = vmatpush1.msra.mxu0 0.0
    %123 = vmatprep.subr.mxu0 0.0
    %124 = vmatpush1.msra.mxu0 0.0
    %125 = vmatprep.subr.mxu0 0.0
    %126 = vmatpush1.msra.mxu0 0.0
    %127 = vmatprep.subr.mxu0 0.0
    %128 = vmatpush1.msra.mxu0 0.0
    %129 = vmatprep.mubr.f32.mxu0 0.0
    %130 = vmatmul.mubr.f32.gmra.mrb[0].mxu0 %v59
    %v131 = vpop.f32.mrb[0].mxu0
    %v132 = vadd.f32 0.0, %v131
    %v133 = vpop.f32.mrb[0].mxu0
    %134 = vdwg.mxu0
    %v135 = vld [vmem:[#allocation7] sm:$0xff]
    %v136 = vld [vmem:[#allocation7 + $0x8] sm:$0xff]
    %v137 = vld [vmem:[#allocation7 + $0x10] sm:$0xff]
    %v138 = vld [vmem:[#allocation7 + $0x18] sm:$0x3f]
    %vm139 = vcmask 244736
    %v141 = vsel %vm139, %v132, 0
    %vm143 = vcmask 1045504
    %v145 = vsel %vm143, %v138, 0
    %147 = vmatprep.subr.mxu0 0.0
    %148 = vmatpush1.msra.mxu0 %v135
    %149 = vmatprep.subr.mxu0 0.0
    %150 = vmatpush1.msra.mxu0 %v136
    %151 = vmatprep.subr.mxu0 0.0
    %152 = vmatpush1.msra.mxu0 %v137
    %153 = vmatprep.subr.mxu0 0.0
    %154 = vmatpush1.msra.mxu0 %v145
    %155 = vmatprep.subr.mxu0 0.0
    %156 = vmatpush1.msra.mxu0 0.0
    %157 = vmatprep.subr.mxu0 0.0
    %158 = vmatpush1.msra.mxu0 0.0
    %159 = vmatprep.subr.mxu0 0.0
    %160 = vmatpush1.msra.mxu0 0.0
    %161 = vmatprep.subr.mxu0 0.0
    %162 = vmatpush1.msra.mxu0 0.0
    %163 = vmatprep.subr.mxu0 0.0
    %164 = vmatpush1.msra.mxu0 0.0
    %165 = vmatprep.subr.mxu0 0.0
    %166 = vmatpush1.msra.mxu0 0.0
    %167 = vmatprep.subr.mxu0 0.0
    %168 = vmatpush1.msra.mxu0 0.0
    %169 = vmatprep.subr.mxu0 0.0
    %170 = vmatpush1.msra.mxu0 0.0
    %171 = vmatprep.subr.mxu0 0.0
    %172 = vmatpush1.msra.mxu0 0.0
    %173 = vmatprep.subr.mxu0 0.0
    %174 = vmatpush1.msra.mxu0 0.0
    %175 = vmatprep.subr.mxu0 0.0
    %176 = vmatpush1.msra.mxu0 0.0
    %177 = vmatprep.subr.mxu0 0.0
    %178 = vmatpush1.msra.mxu0 0.0
    %179 = vmatprep.subr.mxu0 0.0
    %180 = vmatpush1.msra.mxu0 0.0
    %181 = vmatprep.subr.mxu0 0.0
    %182 = vmatpush1.msra.mxu0 0.0
    %183 = vmatprep.subr.mxu0 0.0
    %184 = vmatpush1.msra.mxu0 0.0
    %185 = vmatprep.subr.mxu0 0.0
    %186 = vmatpush1.msra.mxu0 0.0
    %187 = vmatprep.subr.mxu0 0.0
    %188 = vmatpush1.msra.mxu0 0.0
    %189 = vmatprep.subr.mxu0 0.0
    %190 = vmatpush1.msra.mxu0 0.0
    %191 = vmatprep.subr.mxu0 0.0
    %192 = vmatpush1.msra.mxu0 0.0
    %193 = vmatprep.subr.mxu0 0.0
    %194 = vmatpush1.msra.mxu0 0.0
    %195 = vmatprep.subr.mxu0 0.0
    %196 = vmatpush1.msra.mxu0 0.0
    %197 = vmatprep.subr.mxu0 0.0
    %198 = vmatpush1.msra.mxu0 0.0
    %199 = vmatprep.subr.mxu0 0.0
    %200 = vmatpush1.msra.mxu0 0.0
    %201 = vmatprep.subr.mxu0 0.0
    %202 = vmatpush1.msra.mxu0 0.0
    %203 = vmatprep.subr.mxu0 0.0
    %204 = vmatpush1.msra.mxu0 0.0
    %205 = vmatprep.subr.mxu0 0.0
    %206 = vmatpush1.msra.mxu0 0.0
    %207 = vmatprep.subr.mxu0 0.0
    %208 = vmatpush1.msra.mxu0 0.0
    %209 = vmatprep.subr.mxu0 0.0
    %210 = vmatpush1.msra.mxu0 0.0
    %211 = vmatprep.mubr.f32.mxu0 0.0
    %212 = vmatmul.mubr.f32.gmra.mrb[0].mxu0 %v141
    %v213 = vpop.f32.mrb[0].mxu0
    %v214 = vadd.f32 0.0, %v213
    %v215 = vpop.f32.mrb[0].mxu0
    %216 = vdwg.mxu0
    %v217 = vld [vmem:[%s3] sm:$0x1]
    %v219 = vlaneseq
    %v220 = vshrl.u32 %v219, 7
    %v221 = vsub.s32 0, %v220
    %v222 = vrot.slane %v217, %v221
    %v224 = vmul.f32 %v214, %v222
    %vm225 = vcmask 241664
    %226 = vst.msk [vmem:[#allocation8] sm:$0x1f] %vm225, %v224
    // Predicated region
    $region30: #{tpu_custom_call.1} parent=1 // pred_check
      _
    $region31: #{tpu_custom_call.1} parent=1 // pred_check_branch
      %228 = sbr.rel (0) target = $region33
    $region32: #{tpu_custom_call.1} parent=1 // pred_region
      %s230 = ssub.s32 128, 128
      %231 = vsyncadd [#allocation4], %s230
      %s233 = sshll.u32 [#allocation8], 4
      %s234 = int_to_ptr.vmem [resolvable:$true] %s233
      %236 = dma.vmem_to_hbm [thread:$0]  %s234, 128, %s4, [#allocation4]
    $region33: #{tpu_custom_call.1} parent=1 // pred_fallthru
      _
    // Predicated region
    $region34: #{tpu_custom_call.1} parent=1 // pred_check
      _
    $region35: #{tpu_custom_call.1} parent=1 // pred_check_branch
      %238 = sbr.rel (0) target = $region37
    $region36: #{tpu_custom_call.1} parent=1 // pred_region
      %239 = dma.done [#allocation4], 128
    $region37: #{tpu_custom_call.1} parent=1 // pred_fallthru
      _
    %240 = vsyncpa [#allocation3], 1
    %241 = vsyncpa [#allocation6], 1
    %242 = vsyncpa [#allocation4], 1

</llo_original>
